<compile_context>
chip_gen: v6e
topology: v6e:2x2x1
jax: 0.10.0
libtpu: 0.0.40
codegen_flags: <defaults>
</compile_context>

<pallas_src>
import math

import jax
import jax.numpy as jnp
from jax.experimental import pallas as pl
from jax.experimental.pallas import tpu as pltpu


def make_positional_encoding_table(dim: int, max_len: int = 512) -> jnp.ndarray:
    """Replicates PositionalEncoding.__init__ buffer `pe` (shape (max_len, dim))."""
    assert dim % 2 == 0, "PositionalEncoding requires an even embedding dim"
    position = jnp.arange(0, max_len, dtype=jnp.float32)[:, None]             # (max_len, 1)
    div_term = jnp.exp(
        jnp.arange(0, dim, 2, dtype=jnp.float32) * -(math.log(10000.0) / dim)
    )                                                                          # (dim//2,)
    angles = position * div_term                                               # (max_len, dim//2)
    # interleave: pe[:, 0::2] = sin ; pe[:, 1::2] = cos
    pe = jnp.stack([jnp.sin(angles), jnp.cos(angles)], axis=-1).reshape(max_len, dim)
    return pe


def _pos_enc_kernel(x_ref, pe_ref, o_ref):
    # x_ref / o_ref: (TB, TC) tile of the flattened (B, L*D) input/output.
    # pe_ref: (1, TC) tile of the flattened positional table (broadcast over rows).
    o_ref[...] = (x_ref[...] + pe_ref[...]).astype(o_ref.dtype)


def _choose_col_tile(total_cols: int, row_tile: int, itemsize: int,
                     target_bytes: int) -> int:
    """Largest multiple-of-128 column tile keeping one x tile near target_bytes.

    total_cols is always a multiple of 128 (wrapper pads), so the result is
    either a multiple of 128 or the full extent.
    """
    max_cols = max(128, (target_bytes // max(1, row_tile * itemsize)) // 128 * 128)
    return min(total_cols, max_cols)


def positional_encoding_forward(x: jnp.ndarray, pe: jnp.ndarray,
                                *, min_pallas_bytes: int = 512 * 1024) -> jnp.ndarray:
    """x: (B, L, D); pe: (max_len, D). Returns x + pe[:L] broadcast over batch."""
    B, L, D = x.shape
    if L > pe.shape[0]:
        raise ValueError(f"sequence length {L} exceeds positional table max_len {pe.shape[0]}")

    itemsize = jnp.dtype(x.dtype).itemsize

    # Small-shape fallback: the fused XLA add is strictly faster than the
    # pallas_call fixed overhead for tiny activations.
    if B * L * D * itemsize < min_pallas_bytes:
        return x + pe[None, :L, :].astype(x.dtype)

    LD = L * D

    # Cast once in the wrapper (no implicit f32 promotion in-kernel) and
    # flatten so the kernel's last dim is lane-dense.
    pe_flat = pe[:L, :].astype(x.dtype).reshape(1, LD)
    x2 = x.reshape(B, LD)

    # Pad rows to a multiple of 8 (only when B > 8) and columns to a multiple
    # of 128, so block shapes satisfy the (8, 128) constraint, stores stay
    # unmasked, and TB never degenerates to a huge full-extent batch tile.
    B_p = B if B <= 8 else ((B + 7) // 8) * 8
    LD_p = ((LD + 127) // 128) * 128
    if B_p != B or LD_p != LD:
        x2 = jnp.pad(x2, ((0, B_p - B), (0, LD_p - LD)))
    if LD_p != LD:
        pe_flat = jnp.pad(pe_flat, ((0, 0), (0, LD_p - LD)))

    TB = B_p if B_p <= 8 else 8
    # ~4 MiB per x tile: good HBM-roofline tile size; explicit vmem_limit below
    # keeps it safe on v5e's 16 MiB default scoped VMEM and far under v7x's
    # 64 MiB physical VMEM.
    TC = _choose_col_tile(LD_p, TB, itemsize, target_bytes=4 * 1024 * 1024)

    # Double-buffered x + out tiles plus the resident pe tile, with margin.
    vmem_needed = 2 * (2 * TB * TC + TC) * itemsize
    vmem_limit = min(max(vmem_needed + (4 << 20), 16 << 20), 48 << 20)

    # Column axis first (many tiles -> megacore split on v7x), batch axis last
    # (innermost) so the pe block index (0, c) is constant across consecutive
    # steps and the pe tile stays resident in VMEM.
    grid = (pl.cdiv(LD_p, TC), pl.cdiv(B_p, TB))

    out2 = pl.pallas_call(
        _pos_enc_kernel,
        out_shape=jax.ShapeDtypeStruct((B_p, LD_p), x.dtype),
        grid_spec=pltpu.PrefetchScalarGridSpec(
            num_scalar_prefetch=0,
            grid=grid,
            in_specs=[
                pl.BlockSpec((TB, TC), lambda c, b: (b, c)),   # x tile
                pl.BlockSpec((1, TC), lambda c, b: (0, c)),    # pe tile (resident over batch)
            ],
            out_specs=pl.BlockSpec((TB, TC), lambda c, b: (b, c)),
        ),
        input_output_aliases={0: 0},   # out aliases (padded) x: in-place add
        compiler_params=pltpu.CompilerParams(
            dimension_semantics=("parallel", "parallel"),
            vmem_limit_bytes=int(vmem_limit),
        ),
    )(x2, pe_flat)

    if B_p != B or LD_p != LD:
        out2 = out2[:B, :LD]
    return out2.reshape(B, L, D)


if __name__ == "__main__":
    key = jax.random.PRNGKey(0)

    B, L, D = 2, 8, 32
    max_len = 512

    x = jax.random.normal(key, (B, L, D), dtype=jnp.float32)
    pe = make_positional_encoding_table(D, max_len=max_len)
    ref = x + pe[None, :L, :]

    # Pallas path (demo shape is below the small-shape threshold, so force it).
    out = jax.block_until_ready(positional_encoding_forward(x, pe, min_pallas_bytes=0))
    assert out.shape == (B, L, D)
    assert jnp.allclose(out, ref, atol=1e-6), "f32 Pallas mismatch vs reference"

    # Default wrapper (takes the small-shape XLA fallback for this size).
    out_fb = jax.block_until_ready(positional_encoding_forward(x, pe))
    assert jnp.allclose(out_fb, ref, atol=1e-6), "fallback mismatch vs reference"

    # Awkward shape: B > 8 and not a multiple of 8, L*D not a multiple of 128
    # -> exercises the row/column padding path.
    B2, L2, D2 = 10, 7, 30
    x2 = jax.random.normal(jax.random.PRNGKey(1), (B2, L2, D2), dtype=jnp.float32)
    pe2 = make_positional_encoding_table(D2, max_len=max_len)
    out2 = jax.block_until_ready(positional_encoding_forward(x2, pe2, min_pallas_bytes=0))
    ref2 = x2 + pe2[None, :L2, :]
    assert jnp.allclose(out2, ref2, atol=1e-6), "padded-path mismatch vs reference"

    # bf16 path (pe pre-cast in the wrapper -> add in bf16; PyTorch would
    # promote to f32, so the last-ulp difference is expected and documented).
    xb = x.astype(jnp.bfloat16)
    outb = jax.block_until_ready(positional_encoding_forward(xb, pe, min_pallas_bytes=0))
    refb = xb + pe[None, :L, :].astype(jnp.bfloat16)
    assert outb.dtype == jnp.bfloat16
    assert jnp.allclose(outb.astype(jnp.float32), refb.astype(jnp.float32), atol=2e-2), \
        "bf16 mismatch vs reference"

    print("KERNEL_OK")
</pallas_src>

<mosaic_0001>
module attributes {stable_mosaic.version = 11 : i64} {
  func.func @_pos_enc_kernel(%arg0: i32, %arg1: i32, %arg2: memref<2x256xf32, #tpu.memory_space<vmem>>, %arg3: memref<1x256xf32, #tpu.memory_space<vmem>>, %arg4: memref<2x256xf32, #tpu.memory_space<vmem>>) attributes {dimension_semantics = [#tpu.dimension_semantics<parallel>, #tpu.dimension_semantics<parallel>], iteration_bounds = array<i64: 1, 1>, scalar_prefetch = 0 : i64, scratch_operands = 0 : i64, tpu.core_type = #tpu.core_type<tc>, window_params = [{transform_indices = @transform_0, window_bounds = array<i64: 2, 256>}, {transform_indices = @transform_1, window_bounds = array<i64: 1, 256>}, {transform_indices = @transform_2, window_bounds = array<i64: 2, 256>}]} {
    %c0 = arith.constant 0 : index
    %c0_0 = arith.constant 0 : index
    %0 = vector.load %arg2[%c0, %c0_0] : memref<2x256xf32, #tpu.memory_space<vmem>>, vector<2x256xf32>
    %c0_1 = arith.constant 0 : index
    %c0_2 = arith.constant 0 : index
    %1 = vector.load %arg3[%c0_1, %c0_2] : memref<1x256xf32, #tpu.memory_space<vmem>>, vector<1x256xf32>
    %2 = vector.broadcast %1 : vector<1x256xf32> to vector<2x256xf32>
    %3 = arith.addf %0, %2 : vector<2x256xf32>
    %c0_3 = arith.constant 0 : index
    %c0_4 = arith.constant 0 : index
    %4 = vector.load %arg4[%c0_3, %c0_4] : memref<2x256xf32, #tpu.memory_space<vmem>>, vector<2x256xf32>
    tpu.vector_store %arg4[%c0_3, %c0_4], %3 {strides = array<i32>} : memref<2x256xf32, #tpu.memory_space<vmem>>, vector<2x256xf32>,
    return
  }
  func.func @transform_0(%arg0: i32, %arg1: i32) -> (i32, i32) {
    %c0_i32 = arith.constant 0 : i32
    return %arg1, %arg0 : i32, i32
  }
  func.func @transform_1(%arg0: i32, %arg1: i32) -> (i32, i32) {
    %c0_i32 = arith.constant 0 : i32
    %c0_i32_0 = arith.constant 0 : i32
    return %c0_i32, %arg0 : i32, i32
  }
  func.func @transform_2(%arg0: i32, %arg1: i32) -> (i32, i32) {
    %c0_i32 = arith.constant 0 : i32
    return %arg1, %arg0 : i32, i32
  }
}

</mosaic_0001>

<llo_original>
// kernel: tpu_custom_call.1
$region0: #{tpu_custom_call.1}
  #allocation0 [shape = 'u32[]', space=smem, size = 0x4, offset = 0x4, fixed_abs, tag = 'smem constant byte address 0x4 - core index']
  #allocation1 [shape = 'u32[144,128]{1,0:T(1,128)}', space=vmem, size = 0x12000, scoped, tag = 'internal scratch']
  %s0 = inlined_call_operand.hbm [shape: f32[2,256], index: 0, kind: input, shape index: {}, may-alias: {0,2}]
  %s1 = inlined_call_operand.vmem [shape: f32[1,256], index: 1, kind: input, shape index: {}]
  %s2 = inlined_call_operand.hbm [shape: f32[2,256], index: 2, kind: output, shape index: {}, may-alias: {0,2}]
  %s3 = sld [smem:[#allocation0]]
  $region22: #{tpu_custom_call.1} parent=0
    _
  %s5 = ssub.s32 1, %s3
  %s6 = scalar_select 0, %s5, %s3
  $region1: #{tpu_custom_call.1} parent=0
    #allocation2 [shape = 'u8[2048]{0}', space=vmem, size = 0x800, scoped, tag = 'input window, operand 0, single buffered']
    #allocation3 [shape = 's32[1]{0}', space=sflag, size = 0x4, scoped, tag = 'scoped memory for tpu_custom_call.1']
    #allocation4 [shape = 's32[1]{0}', space=sflag, size = 0x4, scoped, tag = 'scoped memory for tpu_custom_call.1']
    #allocation5 [shape = 'u8[2048]{0}', space=vmem, size = 0x800, scoped, tag = 'output window, operand 0, single buffered']
    %7 = vsyncpa [#allocation3], 0
    %8 = vsyncpa [#allocation4], 0
    // Predicated region
    $region2: #{tpu_custom_call.1} parent=1 // pred_check
      _
    $region3: #{tpu_custom_call.1} parent=1 // pred_check_branch
      %10 = sbr.rel (0) target = $region5
    $region4: #{tpu_custom_call.1} parent=1 // pred_region
      %s12 = ssub.s32 64, 64
      %13 = vsyncadd [#allocation3], %s12
      %s15 = sshll.u32 [#allocation2], 4
      %s16 = int_to_ptr.vmem [resolvable:$true] %s15
      %18 = dma.hbm_to_vmem [thread:$0]  %s0, 64, %s16, [#allocation3]
    $region5: #{tpu_custom_call.1} parent=1 // pred_fallthru
      _
    // Predicated region
    $region6: #{tpu_custom_call.1} parent=1 // pred_check
      _
    $region7: #{tpu_custom_call.1} parent=1 // pred_check_branch
      %20 = sbr.rel (0) target = $region9
    $region8: #{tpu_custom_call.1} parent=1 // pred_region
      _
    $region9: #{tpu_custom_call.1} parent=1 // pred_fallthru
      _
    // Predicated region
    $region10: #{tpu_custom_call.1} parent=1 // pred_check
      _
    $region11: #{tpu_custom_call.1} parent=1 // pred_check_branch
      %22 = sbr.rel (0) target = $region13
    $region12: #{tpu_custom_call.1} parent=1 // pred_region
      %23 = dma.done [#allocation3], 64
    $region13: #{tpu_custom_call.1} parent=1 // pred_fallthru
      _
    %v24 = vld [vmem:[#allocation2] sm:$0xf]
    %v25 = vld [vmem:[%s1] sm:$0x3]
    %v27 = vlaneseq
    %v28 = vshrl.u32 %v27, 7
    %v29 = vsub.s32 0, %v28
    %v30 = vrot.slane %v25, %v29
    %v31 = vlaneseq
    %v32 = vshrl.u32 %v31, 7
    %v33 = vsub.s32 1, %v32
    %v34 = vrot.slane %v25, %v33
    %v35 = vcombine.low %v30, %v34
    %v37 = vunpack.c.l.s4 1983009808
    %v38 = vunpack.c.0.s8 %v37
    %v39 = vlaneseq
    %v40 = vshrl.u32 %v39, 7
    %v41 = vsub.s32 %v38, %v40
    %v42 = vrot.slane %v35, %v41
    %v44 = vadd.f32 %v24, %v42
    %45 = vst [vmem:[#allocation5] sm:$0xf] %v44
    // Predicated region
    $region14: #{tpu_custom_call.1} parent=1 // pred_check
      _
    $region15: #{tpu_custom_call.1} parent=1 // pred_check_branch
      %47 = sbr.rel (0) target = $region17
    $region16: #{tpu_custom_call.1} parent=1 // pred_region
      %s49 = ssub.s32 64, 64
      %50 = vsyncadd [#allocation4], %s49
      %s52 = sshll.u32 [#allocation5], 4
      %s53 = int_to_ptr.vmem [resolvable:$true] %s52
      %55 = dma.vmem_to_hbm [thread:$0]  %s53, 64, %s2, [#allocation4]
    $region17: #{tpu_custom_call.1} parent=1 // pred_fallthru
      _
    // Predicated region
    $region18: #{tpu_custom_call.1} parent=1 // pred_check
      _
    $region19: #{tpu_custom_call.1} parent=1 // pred_check_branch
      %57 = sbr.rel (0) target = $region21
    $region20: #{tpu_custom_call.1} parent=1 // pred_region
      %58 = dma.done [#allocation4], 64
    $region21: #{tpu_custom_call.1} parent=1 // pred_fallthru
      _
    %59 = vsyncpa [#allocation3], 1
    %60 = vsyncpa [#allocation4], 1

</llo_original>
